<compile_context>
chip_gen: v5e
topology: v5e:2x2
jax: 0.10.0
libtpu: 0.0.40
codegen_flags: <defaults>
</compile_context>

<pallas_src>
import sys
import functools

import jax
import jax.numpy as jnp
from jax.experimental import pallas as pl
from jax.experimental.pallas import tpu as pltpu

EPS = float(sys.float_info.epsilon)  # matches the torch script's `eps = sys.float_info.epsilon`

_LANE = 128
_SUBLANE = 8
# f32 working-set budget per input tile (elements = bytes / 4). Keeps
# double-buffered input + f32 temporaries + accumulator well under every chip's
# physical VMEM while amortizing the ~0.35us per-grid-step overhead.
_TILE_F32_WORKSET_BYTES = 6 * 1024 * 1024
_VMEM_LIMIT_BYTES = 48 * 1024 * 1024
# Below this element count, a fused XLA reduction beats the fixed pallas_call overhead.
_PALLAS_MIN_ELEMENTS = 1 << 16


def _partition_loss_kernel(x_ref, out_ref, acc_ref, *, num_rows, num_cols,
                           mask_rows, mask_cols):
    """One tile = [TB, H, TF].

    acc_ref is a (TB, TF) f32 scratch carried across the feature-tile axis; out_ref
    is this batch tile's (1, 1) partial sum of squared deviations, written once at
    the last feature step. Final mean/eps/log live in the wrapper.
    """
    f = pl.program_id(1)

    @pl.when(f == 0)
    def _():
        acc_ref[...] = jnp.zeros_like(acc_ref)

    # Two-pass (torch.var-parity) sum of squared deviations over the small,
    # fully-resident head axis.
    # TODO(synk): if a bundle dump shows VALU as the binding slot (bf16 inputs on
    # v6e/v7x), switch to single-pass sum / sum-of-squares to halve VPU ops.
    xf = x_ref[...].astype(jnp.float32)                 # [TB, H, TF]
    mean = jnp.mean(xf, axis=1, keepdims=True)          # [TB, 1, TF]
    diff = xf - mean
    sq = jnp.sum(diff * diff, axis=1)                   # [TB, TF] per-column sum of sq devs

    # Mask ragged edge tiles (reads past the array edge are unspecified values).
    if mask_rows or mask_cols:
        tb, tf = acc_ref.shape
        valid = None
        if mask_rows:
            rows = pl.program_id(0) * tb + jax.lax.broadcasted_iota(jnp.int32, (tb, tf), 0)
            valid = rows < num_rows
        if mask_cols:
            cols = f * tf + jax.lax.broadcasted_iota(jnp.int32, (tb, tf), 1)
            cols_ok = cols < num_cols
            valid = cols_ok if valid is None else (valid & cols_ok)
        sq = jnp.where(valid, sq, 0.0)

    acc_ref[...] += sq                                   # pure vreg adds

    @pl.when(f == pl.num_programs(1) - 1)
    def _():
        out_ref[...] = jnp.sum(acc_ref[...], keepdims=True)


def _partition_loss_reference(x):
    """Pure-JAX reference mirroring the PyTorch module (also the small-input fast path)."""
    num_head = x.shape[1]
    if num_head <= 1:
        return jnp.float32(0.0)
    xf = x.astype(jnp.float32)
    var = jnp.var(xf, axis=1, ddof=1)                   # unbiased, like torch.var default
    return jnp.log(1.0 + num_head / (jnp.mean(var) + EPS))


def _partition_loss_pallas(x, *, max_tile_batch=None, max_tile_feat=None):
    b_dim, num_head = x.shape[0], x.shape[1]
    itemsize = jnp.dtype(x.dtype).itemsize

    # Native layout: [B, H, ...] -> [B, H, F] is a metadata-only reshape (no transpose,
    # no HBM traffic); F is the lane-dense last axis.
    x3 = x.reshape(b_dim, num_head, -1)
    f_dim = x3.shape[2]

    budget_elems = _TILE_F32_WORKSET_BYTES // 4

    # Feature tile (lane axis): multiple of 128 unless it covers all of F; reserve
    # room for TB >= 8 so per-column (TB, TF) arrays fill full (8, 128) vregs.
    tf_cap = max(_LANE, (budget_elems // (_SUBLANE * num_head)) // _LANE * _LANE)
    if max_tile_feat is not None:
        tf_cap = max(_LANE, min(tf_cap, (max_tile_feat // _LANE) * _LANE))
    tf = f_dim if f_dim <= tf_cap else tf_cap

    # Batch tile: whatever of the budget is left, rounded to a sublane multiple.
    tb = max(1, min(b_dim, budget_elems // (num_head * tf)))
    if max_tile_batch is not None:
        tb = max(1, min(tb, max_tile_batch))
    if tb >= _SUBLANE:
        tb = (tb // _SUBLANE) * _SUBLANE

    n_bt = pl.cdiv(b_dim, tb)
    n_ft = pl.cdiv(f_dim, tf)

    kernel = functools.partial(
        _partition_loss_kernel,
        num_rows=b_dim, num_cols=f_dim,
        mask_rows=(b_dim % tb != 0), mask_cols=(f_dim % tf != 0))

    # Cover double-buffered input + f32 temporaries + accumulator.
    # TODO(synk): for pathologically large num_head (single (1, H, 128) tile exceeding
    # physical VMEM) this would need an H-split / chunked variance; not handled here.
    tile_f32_bytes = tb * num_head * tf * 4
    vmem_limit = int(max(_VMEM_LIMIT_BYTES, 6 * tile_f32_bytes))

    partial_sums = pl.pallas_call(
        kernel,
        out_shape=jax.ShapeDtypeStruct((n_bt, 1), jnp.float32),
        grid_spec=pltpu.PrefetchScalarGridSpec(
            num_scalar_prefetch=0,
            grid=(n_bt, n_ft),
            in_specs=[pl.BlockSpec((tb, num_head, tf), lambda b, f: (b, 0, f))],
            out_specs=pl.BlockSpec((1, 1), lambda b, f: (b, 0)),
            scratch_shapes=[pltpu.VMEM((tb, tf), jnp.float32)],
        ),
        compiler_params=pltpu.CompilerParams(
            # Batch-tile axis carries no dependency -> "parallel" lets v7x's two
            # TensorCores split the stream; the feature axis carries the accumulator.
            dimension_semantics=("parallel", "arbitrary"),
            vmem_limit_bytes=vmem_limit,
        ),
        cost_estimate=pl.CostEstimate(
            flops=4 * x.size,
            transcendentals=0,
            bytes_accessed=x.size * itemsize + n_bt * 4,
        ),
    )(x3)

    # Scalar finalize (mean over true element count, eps, log) in the wrapper.
    total_sq = jnp.sum(partial_sums)
    var_mean = total_sq / jnp.float32((num_head - 1) * b_dim * f_dim)
    return jnp.log(1.0 + jnp.float32(num_head) / (var_mean + EPS))


def partition_loss(x, *, force_pallas=False, max_tile_batch=None, max_tile_feat=None):
    """PartitionLoss.forward for x of shape [B, num_head, ...]; returns scalar f32."""
    num_head = x.shape[1]
    if num_head <= 1:
        # Static branch, same as the PyTorch module returning python 0.
        return jnp.float32(0.0)
    if not force_pallas and x.size < _PALLAS_MIN_ELEMENTS:
        # Tiny tensors: fused XLA path beats per-pallas_call overhead.
        return _partition_loss_reference(x)
    return _partition_loss_pallas(
        x, max_tile_batch=max_tile_batch, max_tile_feat=max_tile_feat)


if __name__ == "__main__":
    key = jax.random.PRNGKey(0)
    k1, k2 = jax.random.split(key)

    # DAN-sized input: batch=2, num_head=4, 16x16 spatial (forced through the kernel).
    x_small = jax.random.normal(k1, (2, 4, 16, 16), dtype=jnp.float32)
    got_small = jax.block_until_ready(partition_loss(x_small, force_pallas=True))
    ref_small = jax.block_until_ready(_partition_loss_reference(x_small))
    assert jnp.allclose(got_small, ref_small, rtol=1e-5, atol=1e-5), (got_small, ref_small)

    # Multi-tile grid with ragged batch AND ragged feature tiles: exercises the
    # in-kernel masks, the per-feature-step accumulation, and the per-batch-tile
    # partial-sum outputs.
    x_big = jax.random.normal(k2, (10, 4, 8, 48), dtype=jnp.float32)
    got_big = jax.block_until_ready(
        partition_loss(x_big, force_pallas=True, max_tile_batch=8, max_tile_feat=256))
    ref_big = jax.block_until_ready(_partition_loss_reference(x_big))
    assert jnp.allclose(got_big, ref_big, rtol=1e-5, atol=1e-5), (got_big, ref_big)

    # num_head == 1 static branch.
    assert partition_loss(x_small[:, :1]) == 0.0

    print("KERNEL_OK")
</pallas_src>

<mosaic_0001>
module attributes {stable_mosaic.version = 11 : i64} {
  func.func @_partition_loss_kernel(%arg0: i32, %arg1: i32, %arg2: memref<2x4x256xf32, #tpu.memory_space<vmem>>, %arg3: memref<1x1xf32, #tpu.memory_space<vmem>>, %arg4: memref<2x256xf32, #tpu.memory_space<vmem>>) attributes {dimension_semantics = [#tpu.dimension_semantics<parallel>, #tpu.dimension_semantics<arbitrary>], iteration_bounds = array<i64: 1, 1>, scalar_prefetch = 0 : i64, scratch_operands = 1 : i64, tpu.core_type = #tpu.core_type<tc>, window_params = [{transform_indices = @transform_0, window_bounds = array<i64: 2, 4, 256>}, {transform_indices = @transform_1, window_bounds = array<i64: 1, 1>}]} {
    %c0_i32 = arith.constant 0 : i32
    %0 = arith.cmpi eq, %arg1, %c0_i32 : i32
    %1 = arith.extui %0 : i1 to i32
    %c0_i32_0 = arith.constant 0 : i32
    %2 = arith.cmpi ne, %1, %c0_i32_0 : i32
    scf.if %2 {
      %cst_11 = arith.constant 0.000000e+00 : f32
      %18 = vector.broadcast %cst_11 : f32 to vector<2x256xf32>
      %c0_12 = arith.constant 0 : index
      %c0_13 = arith.constant 0 : index
      %19 = vector.load %arg4[%c0_12, %c0_13] : memref<2x256xf32, #tpu.memory_space<vmem>>, vector<2x256xf32>
      tpu.vector_store %arg4[%c0_12, %c0_13], %18 {strides = array<i32>} : memref<2x256xf32, #tpu.memory_space<vmem>>, vector<2x256xf32>,
    } else {
    }
    %c0 = arith.constant 0 : index
    %c0_1 = arith.constant 0 : index
    %c0_2 = arith.constant 0 : index
    %3 = vector.load %arg2[%c0, %c0_1, %c0_2] : memref<2x4x256xf32, #tpu.memory_space<vmem>>, vector<2x4x256xf32>
    %cst = arith.constant dense<0.000000e+00> : vector<2x256xf32>
    %4 = vector.multi_reduction <add>, %3, %cst [1] : vector<2x4x256xf32> to vector<2x256xf32>
    %5 = vector.shape_cast %4 : vector<2x256xf32> to vector<2x1x256xf32>
    %cst_3 = arith.constant 4.000000e+00 : f32
    %6 = vector.broadcast %cst_3 : f32 to vector<2x1x256xf32>
    %7 = arith.divf %5, %6 : vector<2x1x256xf32>
    %8 = vector.broadcast %7 : vector<2x1x256xf32> to vector<2x4x256xf32>
    %9 = arith.subf %3, %8 : vector<2x4x256xf32>
    %10 = arith.mulf %9, %9 : vector<2x4x256xf32>
    %cst_4 = arith.constant dense<0.000000e+00> : vector<2x256xf32>
    %11 = vector.multi_reduction <add>, %10, %cst_4 [1] : vector<2x4x256xf32> to vector<2x256xf32>
    %c0_5 = arith.constant 0 : index
    %c0_6 = arith.constant 0 : index
    %12 = vector.load %arg4[%c0_5, %c0_6] : memref<2x256xf32, #tpu.memory_space<vmem>>, vector<2x256xf32>
    %13 = arith.addf %12, %11 : vector<2x256xf32>
    %c0_7 = arith.constant 0 : index
    %c0_8 = arith.constant 0 : index
    %14 = vector.load %arg4[%c0_7, %c0_8] : memref<2x256xf32, #tpu.memory_space<vmem>>, vector<2x256xf32>
    tpu.vector_store %arg4[%c0_7, %c0_8], %13 {strides = array<i32>} : memref<2x256xf32, #tpu.memory_space<vmem>>, vector<2x256xf32>,
    %c0_i32_9 = arith.constant 0 : i32
    %15 = arith.cmpi eq, %arg1, %c0_i32_9 : i32
    %16 = arith.extui %15 : i1 to i32
    %c0_i32_10 = arith.constant 0 : i32
    %17 = arith.cmpi ne, %16, %c0_i32_10 : i32
    scf.if %17 {
      %c0_11 = arith.constant 0 : index
      %c0_12 = arith.constant 0 : index
      %18 = vector.load %arg4[%c0_11, %c0_12] : memref<2x256xf32, #tpu.memory_space<vmem>>, vector<2x256xf32>
      %19 = vector.shape_cast %18 : vector<2x256xf32> to vector<1x2x256xf32>
      %cst_13 = arith.constant dense<0.000000e+00> : vector<1xf32>
      %20 = vector.multi_reduction <add>, %19, %cst_13 [1, 2] : vector<1x2x256xf32> to vector<1xf32>
      %21 = vector.shape_cast %20 : vector<1xf32> to vector<1x1x1xf32>
      %22 = vector.extract %21[0, 0, 0] : f32 from vector<1x1x1xf32>
      %23 = vector.broadcast %22 : f32 to vector<1x1xf32>
      %c0_14 = arith.constant 0 : index
      %c0_15 = arith.constant 0 : index
      %24 = vector.load %arg3[%c0_14, %c0_15] : memref<1x1xf32, #tpu.memory_space<vmem>>, vector<1x1xf32>
      tpu.vector_store %arg3[%c0_14, %c0_15], %23 {strides = array<i32>} : memref<1x1xf32, #tpu.memory_space<vmem>>, vector<1x1xf32>,
    } else {
    }
    return
  }
  func.func @transform_0(%arg0: i32, %arg1: i32) -> (i32, i32, i32) {
    %c0_i32 = arith.constant 0 : i32
    %c0_i32_0 = arith.constant 0 : i32
    return %arg0, %c0_i32, %arg1 : i32, i32, i32
  }
  func.func @transform_1(%arg0: i32, %arg1: i32) -> (i32, i32) {
    %c0_i32 = arith.constant 0 : i32
    %c0_i32_0 = arith.constant 0 : i32
    return %arg0, %c0_i32 : i32, i32
  }
}

</mosaic_0001>

<llo_original>
// kernel: tpu_custom_call.1
$region0: #{tpu_custom_call.1}
  #allocation0 [shape = 'u32[]', space=smem, size = 0x4, offset = 0x4, fixed_abs, tag = 'smem constant byte address 0x4 - core index']
  #allocation1 [shape = 'u32[72,128]{1,0:T(1,128)}', space=vmem, size = 0x9000, scoped, tag = 'internal scratch']
  #allocation2 [shape = 'f32[2,256]{1,0:T(2,128)}', space=vmem, size = 0x800, scoped, tag = 'scratch operand']
  %s0 = inlined_call_operand.hbm [shape: f32[2,4,256], index: 0, kind: input, shape index: {}]
  %s1 = inlined_call_operand.hbm [shape: f32[1,1], index: 1, kind: output, shape index: {}]
  %s2 = sld [smem:[#allocation0]]
  $region26: #{tpu_custom_call.1} parent=0
    _
  %s4 = ssub.s32 1, %s2
  %s5 = scalar_select 0, %s4, %s2
  $region1: #{tpu_custom_call.1} parent=0
    #allocation3 [shape = 'u8[8192]{0}', space=vmem, size = 0x2000, scoped, tag = 'input window, operand 0, single buffered']
    #allocation4 [shape = 's32[1]{0}', space=sflag, size = 0x4, scoped, tag = 'scoped memory for tpu_custom_call.1']
    #allocation5 [shape = 's32[1]{0}', space=sflag, size = 0x4, scoped, tag = 'scoped memory for tpu_custom_call.1']
    #allocation6 [shape = 'u8[512]{0}', space=vmem, size = 0x400, scoped, tag = 'output window, operand 0, single buffered']
    %6 = vsyncpa [#allocation4], 0
    %7 = vsyncpa [#allocation5], 0
    // Predicated region
    $region2: #{tpu_custom_call.1} parent=1 // pred_check
      _
    $region3: #{tpu_custom_call.1} parent=1 // pred_check_branch
      %9 = sbr.rel (0) target = $region5
    $region4: #{tpu_custom_call.1} parent=1 // pred_region
      %11 = vsyncadd [#allocation4], 0
      %s12 = sshll.u32 %s0, 4
      %s13 = int_to_ptr.hbm [resolvable:$true] %s12
      %s14 = sshll.u32 [#allocation3], 4
      %s15 = int_to_ptr.vmem [resolvable:$true] %s14
      %20 = dma.hbm_to_vmem [thread:$0]  %s13, 256, %s15, [#allocation4], 128, 128, 8
    $region5: #{tpu_custom_call.1} parent=1 // pred_fallthru
      _
    // Predicated region
    $region6: #{tpu_custom_call.1} parent=1 // pred_check
      _
    $region7: #{tpu_custom_call.1} parent=1 // pred_check_branch
      %22 = sbr.rel (0) target = $region9
    $region8: #{tpu_custom_call.1} parent=1 // pred_region
      %24 = dma.done [#allocation4], 256
    $region9: #{tpu_custom_call.1} parent=1 // pred_fallthru
      _
    %p25 = scmp.eq.s32.totalorder 0, 0
    // Predicated region
    $region10: #{tpu_custom_call.1} parent=1 // pred_check
      %p26 = pneg %p25
    $region11: #{tpu_custom_call.1} parent=1 // pred_check_branch
      %28 = sbr.rel (%p26) target = $region13
    $region12: #{tpu_custom_call.1} parent=1 // pred_region
      %29 = vst [vmem:[#allocation2] sm:$0xf] 0.0
    $region13: #{tpu_custom_call.1} parent=1 // pred_fallthru
      _
    %v30 = vld [vmem:[#allocation3] sm:$0xff]
    %v31 = vld [vmem:[#allocation3 + $0x8] sm:$0xff]
    %34 = vst [vmem:[#allocation1] ss:$2 sm:$0xff] %v30
    %v35 = vld.sshfl [vmem:[#allocation1] sm:$0xff pattern:$0x75316420]
    %v36 = vld.sshfl [vmem:[#allocation1 + $0x8] sm:$0xff pattern:$0x75316420]
    %s37 = scalar_lea.vmem [#allocation1], 16
    %38 = vst [vmem:[%s37] ss:$2 sm:$0xff] %v31
    %v39 = vld.sshfl [vmem:[#allocation1 + $0x10] sm:$0xff pattern:$0x75316420]
    %v40 = vld.sshfl [vmem:[#allocation1 + $0x18] sm:$0xff pattern:$0x75316420]
    %vm45 = vcmask 1043456
    %v46 = vsel %vm45, %v35, 0.0
    %v47 = vrot.slane %v46, 4
    %v48 = vadd.f32 %v46, %v47
    %v49 = vrot.slane %v48, 2
    %v50 = vadd.f32 %v48, %v49
    %v51 = vrot.slane %v50, 1
    %v52 = vadd.f32 %v50, %v51
    %v53 = vsel %vm45, %v36, 0.0
    %v54 = vrot.slane %v53, 4
    %v55 = vadd.f32 %v53, %v54
    %v56 = vrot.slane %v55, 2
    %v57 = vadd.f32 %v55, %v56
    %v58 = vrot.slane %v57, 1
    %v59 = vadd.f32 %v57, %v58
    %v60 = vsel %vm45, %v39, 0.0
    %v61 = vrot.slane %v60, 4
    %v62 = vadd.f32 %v60, %v61
    %v63 = vrot.slane %v62, 2
    %v64 = vadd.f32 %v62, %v63
    %v65 = vrot.slane %v64, 1
    %v66 = vadd.f32 %v64, %v65
    %v67 = vsel %vm45, %v40, 0.0
    %v68 = vrot.slane %v67, 4
    %v69 = vadd.f32 %v67, %v68
    %v70 = vrot.slane %v69, 2
    %v71 = vadd.f32 %v69, %v70
    %v72 = vrot.slane %v71, 1
    %v73 = vadd.f32 %v71, %v72
    %v74 = vrcp.pop 4.0
    %v75 = vmul.f32 4.0, %v74
    %v76 = vsub.f32 1.0, %v75
    %v77 = vmul.f32 %v74, %v76
    %v78 = vadd.f32 %v74, %v77
    %vm79 = vweird.f32 %v74
    %v80 = vsel %vm79, %v74, %v78
    %v81 = vmul.f32 %v52, %v80
    %v82 = vmul.f32 %v59, %v80
    %v83 = vmul.f32 %v66, %v80
    %v84 = vmul.f32 %v73, %v80
    %v89 = vrot.slane %v82, 4
    %v90 = vrot.slane %v84, 4
    %v91 = vsel %vm45, %v81, %v89
    %v92 = vsel %vm45, %v83, %v90
    %v95 = vsub.f32 %v30, %v91
    %v96 = vsub.f32 %v31, %v92
    %v97 = vmul.f32 %v95, %v95
    %v98 = vmul.f32 %v96, %v96
    %101 = vst [vmem:[#allocation1] ss:$2 sm:$0xff] %v97
    %v102 = vld.sshfl [vmem:[#allocation1] sm:$0xff pattern:$0x75316420]
    %v103 = vld.sshfl [vmem:[#allocation1 + $0x8] sm:$0xff pattern:$0x75316420]
    %s104 = scalar_lea.vmem [#allocation1], 16
    %105 = vst [vmem:[%s104] ss:$2 sm:$0xff] %v98
    %v106 = vld.sshfl [vmem:[#allocation1 + $0x10] sm:$0xff pattern:$0x75316420]
    %v107 = vld.sshfl [vmem:[#allocation1 + $0x18] sm:$0xff pattern:$0x75316420]
    %v112 = vsel %vm45, %v102, 0.0
    %v113 = vrot.slane %v112, 4
    %v114 = vadd.f32 %v112, %v113
    %v115 = vrot.slane %v114, 2
    %v116 = vadd.f32 %v114, %v115
    %v117 = vrot.slane %v116, 1
    %v118 = vadd.f32 %v116, %v117
    %v119 = vsel %vm45, %v103, 0.0
    %v120 = vrot.slane %v119, 4
    %v121 = vadd.f32 %v119, %v120
    %v122 = vrot.slane %v121, 2
    %v123 = vadd.f32 %v121, %v122
    %v124 = vrot.slane %v123, 1
    %v125 = vadd.f32 %v123, %v124
    %v126 = vsel %vm45, %v106, 0.0
    %v127 = vrot.slane %v126, 4
    %v128 = vadd.f32 %v126, %v127
    %v129 = vrot.slane %v128, 2
    %v130 = vadd.f32 %v128, %v129
    %v131 = vrot.slane %v130, 1
    %v132 = vadd.f32 %v130, %v131
    %v133 = vsel %vm45, %v107, 0.0
    %v134 = vrot.slane %v133, 4
    %v135 = vadd.f32 %v133, %v134
    %v136 = vrot.slane %v135, 2
    %v137 = vadd.f32 %v135, %v136
    %v138 = vrot.slane %v137, 1
    %v139 = vadd.f32 %v137, %v138
    %v140 = vld [vmem:[#allocation2] sm:$0xf]
    %v145 = vrot.slane %v125, 6
    %v146 = vrot.slane %v139, 6
    %vm147 = vcmask 1041408
    %v148 = vsel %vm147, %v118, %v145
    %v149 = vsel %vm147, %v132, %v146
    %vm150 = vcmask 1044484
    %v151 = vsel %vm150, %v148, %v148
    %vm152 = vcmask 1046534
    %v153 = vsel %vm152, %v148, %v151
    %v154 = vrot.slane %v149, 7
    %vm155 = vcmask 1041409
    %v156 = vsel %vm155, %v154, %v153
    %vm157 = vcmask 1043459
    %v158 = vsel %vm157, %v154, %v156
    %vm159 = vcmask 1045509
    %v160 = vsel %vm159, %v154, %v158
    %vm161 = vcmask 1047559
    %v162 = vsel %vm161, %v154, %v160
    %v164 = vadd.f32 %v140, %v162
    %165 = vst [vmem:[#allocation2] sm:$0xf] %v164
    // Predicated region
    $region14: #{tpu_custom_call.1} parent=1 // pred_check
      %p166 = pneg %p25
    $region15: #{tpu_custom_call.1} parent=1 // pred_check_branch
      %168 = sbr.rel (%p166) target = $region17
    $region16: #{tpu_custom_call.1} parent=1 // pred_region
      %v169 = vld [vmem:[#allocation2] sm:$0xf]
      %171 = vst [vmem:[#allocation1] ss:$4 sm:$0xff] %v169
      %v172 = vld.sshfl [vmem:[#allocation1] sm:$0xff pattern:$0x73625140]
      %v173 = vld.sshfl [vmem:[#allocation1 + $0x8] sm:$0xff pattern:$0x73625140]
      %v176 = vsel %vm147, %v172, 0.0
      %v177 = vsel %vm147, %v173, 0.0
      %v178 = vadd.f32 %v176, %v177
      %179 = vadd.xlane.f32.xlu0 %v178
      %v180 = vpop.xlane.xlu0 %179
      %v181 = vrot.slane %v180, 4
      %v182 = vadd.f32 %v180, %v181
      %v183 = vrot.slane %v182, 2
      %v184 = vadd.f32 %v182, %v183
      %v185 = vrot.slane %v184, 1
      %v186 = vadd.f32 %v184, %v185
      %s187 = vtos %v186
      %v188 = vstv %s187
      %vm189 = vcmask 0
      %190 = vst.msk [vmem:[#allocation6] sm:$0x1] %vm189, %v188
    $region17: #{tpu_custom_call.1} parent=1 // pred_fallthru
      _
    // Predicated region
    $region18: #{tpu_custom_call.1} parent=1 // pred_check
      _
    $region19: #{tpu_custom_call.1} parent=1 // pred_check_branch
      %192 = sbr.rel (0) target = $region21
    $region20: #{tpu_custom_call.1} parent=1 // pred_region
      %194 = vsyncadd [#allocation5], 0
      %s196 = sshll.u32 [#allocation6], 4
      %s197 = int_to_ptr.vmem [resolvable:$true] %s196
      %s198 = sshll.u32 %s1, 4
      %s199 = int_to_ptr.hbm [resolvable:$true] %s198
      %201 = dma.vmem_to_hbm [thread:$0]  %s197, 16, %s199, [#allocation5]
    $region21: #{tpu_custom_call.1} parent=1 // pred_fallthru
      _
    // Predicated region
    $region22: #{tpu_custom_call.1} parent=1 // pred_check
      _
    $region23: #{tpu_custom_call.1} parent=1 // pred_check_branch
      %203 = sbr.rel (0) target = $region25
    $region24: #{tpu_custom_call.1} parent=1 // pred_region
      %205 = dma.done [#allocation5], 16
    $region25: #{tpu_custom_call.1} parent=1 // pred_fallthru
      _
    %206 = vsyncpa [#allocation4], 1
    %207 = vsyncpa [#allocation5], 1

</llo_original>
